<compile_context>
chip_gen: v7x
topology: tpu7x:2x2x1
jax: 0.10.0
libtpu: 0.0.40
codegen_flags: <defaults>
</compile_context>

<pallas_src>
import jax
import jax.numpy as jnp
from jax import lax
from jax.experimental import pallas as pl
from jax.experimental.pallas import tpu as pltpu

ALPHA = 3.0
_BIG = 1e30
_EPS = 1e-6


def _pick_tile(n):
    """Largest MXU-friendly tile that evenly divides n (fallback: whole axis)."""
    for t in (256, 128):
        if n % t == 0:
            return t
    return n


def _normalize_kernel(x_ref, xn_ref, sq_ref):
    # x_ref: (TR, D) f32 -> xn_ref: (TR, D) f32, sq_ref: (TR, 1) f32
    x = x_ref[...].astype(jnp.float32)
    norm = jnp.sqrt(jnp.sum(x * x, axis=-1, keepdims=True))        # (TR, 1)
    inv = pl.reciprocal(norm + _EPS, approx=False)                 # EUP, exact
    xn = x * inv
    xn_ref[...] = xn
    sq_ref[...] = jnp.sum(xn * xn, axis=-1, keepdims=True)


def _mine_loss_kernel(xr_ref, xc_ref, sqr_ref, sqc_ref, labr_ref, labc_ref,
                      loss_ref, ap2_ref, an2_ref):
    # xr_ref:  (TR, D)  row (anchor) features, normalized
    # xc_ref:  (TC, D)  column (candidate) features, normalized
    # sqr_ref: (TR, 1)  row squared norms
    # sqc_ref: (1, TC)  column squared norms
    # labr_ref:(TR, 1)  row labels          labc_ref:(1, TC) column labels
    # loss_ref:(TR, 1)  per-anchor softplus loss (written at last k)
    # ap2_ref / an2_ref: (TR, 1) running max/min of squared distances
    k = pl.program_id(1)

    @pl.when(k == 0)
    def _():
        ap2_ref[...] = jnp.full_like(ap2_ref, -_BIG)
        an2_ref[...] = jnp.full_like(an2_ref, _BIG)

    # Gram tile on the MXU: A @ B^T expressed directly (no in-kernel transpose).
    gram = lax.dot_general(
        xr_ref[...], xc_ref[...],
        dimension_numbers=(((1,), (1,)), ((), ())),
        preferred_element_type=jnp.float32)                        # (TR, TC)

    # Squared pairwise distances (mine on dist^2; sqrt deferred to the end).
    dist2 = (sqr_ref[...] + sqc_ref[...]) - 2.0 * gram             # (TR, TC)

    is_pos = labr_ref[...] == labc_ref[...]                        # (TR, TC)

    ap2_ref[...] = jnp.maximum(
        ap2_ref[...],
        jnp.max(jnp.where(is_pos, dist2, -_BIG), axis=-1, keepdims=True))
    an2_ref[...] = jnp.minimum(
        an2_ref[...],
        jnp.min(jnp.where(is_pos, _BIG, dist2), axis=-1, keepdims=True))

    @pl.when(k == pl.num_programs(1) - 1)
    def _():
        dist_ap = jnp.sqrt(jnp.maximum(ap2_ref[...], _EPS))        # (TR, 1)
        dist_an = jnp.sqrt(jnp.maximum(an2_ref[...], _EPS))        # (TR, 1)
        z = ALPHA * (dist_ap - dist_an)
        # numerically-stable softplus == log(1 + exp(z))
        loss_ref[...] = jnp.maximum(z, 0.0) + jnp.log1p(jnp.exp(-jnp.abs(z)))


def weighted_soft_triplet_loss(inputs, targets):
    """inputs: (N, D) float features; targets: (N,) int labels -> scalar loss."""
    n, d = inputs.shape
    x = inputs.astype(jnp.float32)
    lab = targets.astype(jnp.int32)

    tr = _pick_tile(n)   # row (anchor) tile
    tc = _pick_tile(n)   # column (candidate) tile

    # ---- Pass 1: L2 normalize + per-row squared norms (tiled over rows) ----
    xn, sq = pl.pallas_call(
        _normalize_kernel,
        grid=(n // tr,),
        in_specs=[pl.BlockSpec((tr, d), lambda i: (i, 0))],
        out_specs=[pl.BlockSpec((tr, d), lambda i: (i, 0)),
                   pl.BlockSpec((tr, 1), lambda i: (i, 0))],
        out_shape=(jax.ShapeDtypeStruct((n, d), jnp.float32),
                   jax.ShapeDtypeStruct((n, 1), jnp.float32)),
        compiler_params=pltpu.CompilerParams(
            dimension_semantics=("parallel",)),
    )(x)

    sq_row = sq                    # (N, 1)
    sq_col = sq.reshape(1, n)      # (1, N)  (cheap wrapper reshape, no XLU work in-kernel)
    lab_row = lab.reshape(n, 1)    # (N, 1)
    lab_col = lab.reshape(1, n)    # (1, N)

    # ---- Pass 2: tiled pairwise distance + hard mining + per-anchor loss ----
    per_anchor = pl.pallas_call(
        _mine_loss_kernel,
        grid=(n // tr, n // tc),
        in_specs=[
            pl.BlockSpec((tr, d), lambda i, k: (i, 0)),   # anchor rows
            pl.BlockSpec((tc, d), lambda i, k: (k, 0)),   # candidate cols
            pl.BlockSpec((tr, 1), lambda i, k: (i, 0)),   # sq rows
            pl.BlockSpec((1, tc), lambda i, k: (0, k)),   # sq cols
            pl.BlockSpec((tr, 1), lambda i, k: (i, 0)),   # labels rows
            pl.BlockSpec((1, tc), lambda i, k: (0, k)),   # labels cols
        ],
        out_specs=pl.BlockSpec((tr, 1), lambda i, k: (i, 0)),
        out_shape=jax.ShapeDtypeStruct((n, 1), jnp.float32),
        scratch_shapes=[pltpu.VMEM((tr, 1), jnp.float32),   # running max dist_ap^2
                        pltpu.VMEM((tr, 1), jnp.float32)],  # running min dist_an^2
        compiler_params=pltpu.CompilerParams(
            dimension_semantics=("parallel", "arbitrary"),
            vmem_limit_bytes=32 * 1024 * 1024),
    )(xn, xn, sq_row, sq_col, lab_row, lab_col)

    # Tiny final reduction in plain JAX (megacore-safe; N elements).
    return jnp.mean(per_anchor)


def _reference_loss(inputs, targets):
    # plain-JAX reference for a sanity check
    x = inputs.astype(jnp.float32)
    xn = x / (jnp.linalg.norm(x, axis=-1, keepdims=True) + 1e-6)
    sq = jnp.sum(xn * xn, axis=-1, keepdims=True)
    dist2 = sq + sq.T - 2.0 * xn @ xn.T
    dist = jnp.sqrt(jnp.maximum(dist2, 1e-6))
    is_pos = targets[:, None] == targets[None, :]
    dist_ap = jnp.max(jnp.where(is_pos, dist, -jnp.inf), axis=-1)
    dist_an = jnp.min(jnp.where(is_pos, jnp.inf, dist), axis=-1)
    return jnp.mean(jnp.log1p(jnp.exp(ALPHA * (dist_ap - dist_an))))


if __name__ == "__main__":
    key = jax.random.PRNGKey(0)
    N, D = 8, 32
    inputs = jax.random.normal(key, (N, D), dtype=jnp.float32)
    # 4 classes x 2 samples each (equal samples per label, as the module assumes)
    targets = jnp.array([0, 0, 1, 1, 2, 2, 3, 3], dtype=jnp.int32)

    loss = weighted_soft_triplet_loss(inputs, targets)
    jax.block_until_ready(loss)

    ref = _reference_loss(inputs, targets)
    assert jnp.allclose(loss, ref, rtol=1e-5, atol=1e-5), (loss, ref)
    print("KERNEL_OK")
</pallas_src>

<mosaic_0001>
module attributes {stable_mosaic.version = 11 : i64} {
  func.func @_normalize_kernel(%arg0: i32, %arg1: memref<8x32xf32, #tpu.memory_space<vmem>>, %arg2: memref<8x32xf32, #tpu.memory_space<vmem>>, %arg3: memref<8x1xf32, #tpu.memory_space<vmem>>) attributes {dimension_semantics = [#tpu.dimension_semantics<parallel>], iteration_bounds = array<i64: 1>, scalar_prefetch = 0 : i64, scratch_operands = 0 : i64, tpu.core_type = #tpu.core_type<tc>, window_params = [{transform_indices = @transform_0, window_bounds = array<i64: 8, 32>}, {transform_indices = @transform_1, window_bounds = array<i64: 8, 32>}, {transform_indices = @transform_2, window_bounds = array<i64: 8, 1>}]} {
    %c0 = arith.constant 0 : index
    %c0_0 = arith.constant 0 : index
    %0 = vector.load %arg1[%c0, %c0_0] : memref<8x32xf32, #tpu.memory_space<vmem>>, vector<8x32xf32>
    %1 = arith.mulf %0, %0 : vector<8x32xf32>
    %cst = arith.constant dense<0.000000e+00> : vector<8xf32>
    %2 = vector.multi_reduction <add>, %1, %cst [1] : vector<8x32xf32> to vector<8xf32>
    %3 = vector.shape_cast %2 : vector<8xf32> to vector<8x1xf32>
    %4 = math.sqrt %3 : vector<8x1xf32>
    %cst_1 = arith.constant 9.99999997E-7 : f32
    %5 = vector.broadcast %cst_1 : f32 to vector<8x1xf32>
    %6 = arith.addf %4, %5 : vector<8x1xf32>
    %7 = tpu.reciprocal %6 : vector<8x1xf32> -> vector<8x1xf32>
    %8 = vector.broadcast %7 : vector<8x1xf32> to vector<8x32xf32>
    %9 = arith.mulf %0, %8 : vector<8x32xf32>
    %c0_2 = arith.constant 0 : index
    %c0_3 = arith.constant 0 : index
    %10 = vector.load %arg2[%c0_2, %c0_3] : memref<8x32xf32, #tpu.memory_space<vmem>>, vector<8x32xf32>
    tpu.vector_store %arg2[%c0_2, %c0_3], %9 {strides = array<i32>} : memref<8x32xf32, #tpu.memory_space<vmem>>, vector<8x32xf32>,
    %11 = arith.mulf %9, %9 : vector<8x32xf32>
    %cst_4 = arith.constant dense<0.000000e+00> : vector<8xf32>
    %12 = vector.multi_reduction <add>, %11, %cst_4 [1] : vector<8x32xf32> to vector<8xf32>
    %13 = vector.shape_cast %12 : vector<8xf32> to vector<8x1xf32>
    %c0_5 = arith.constant 0 : index
    %c0_6 = arith.constant 0 : index
    %14 = vector.load %arg3[%c0_5, %c0_6] : memref<8x1xf32, #tpu.memory_space<vmem>>, vector<8x1xf32>
    tpu.vector_store %arg3[%c0_5, %c0_6], %13 {strides = array<i32>} : memref<8x1xf32, #tpu.memory_space<vmem>>, vector<8x1xf32>,
    return
  }
  func.func @transform_0(%arg0: i32) -> (i32, i32) {
    %c0_i32 = arith.constant 0 : i32
    %c0_i32_0 = arith.constant 0 : i32
    return %arg0, %c0_i32 : i32, i32
  }
  func.func @transform_1(%arg0: i32) -> (i32, i32) {
    %c0_i32 = arith.constant 0 : i32
    %c0_i32_0 = arith.constant 0 : i32
    return %arg0, %c0_i32 : i32, i32
  }
  func.func @transform_2(%arg0: i32) -> (i32, i32) {
    %c0_i32 = arith.constant 0 : i32
    %c0_i32_0 = arith.constant 0 : i32
    return %arg0, %c0_i32 : i32, i32
  }
}

</mosaic_0001>

<llo_original>
// kernel: tpu_custom_call.1
$region0: #{tpu_custom_call.1}
  #allocation0 [shape = 'u32[]', space=smem, size = 0x4, offset = 0x4, fixed_abs, tag = 'smem constant byte address 0x4 - core index']
  #allocation1 [shape = 'u32[144,128]{1,0:T(1,128)}', space=vmem, size = 0x12000, scoped, tag = 'internal scratch']
  %s0 = inlined_call_operand.hbm [shape: f32[8,32], index: 0, kind: input, shape index: {}]
  %s1 = inlined_call_operand.hbm [shape: f32[8,32], index: 1, kind: output, shape index: {0}]
  %s2 = inlined_call_operand.vmem [shape: f32[8,1], index: 2, kind: output, shape index: {1}]
  %3 = xla_tuple %s1, %s2
  %s4 = sld [smem:[#allocation0]]
  $region26: #{tpu_custom_call.1} parent=0
    _
  %s6 = ssub.s32 1, %s4
  %s7 = scalar_select 0, %s6, %s4
  $region1: #{tpu_custom_call.1} parent=0
    #allocation2 [shape = 'u8[4096]{0}', space=vmem, size = 0x1000, scoped, tag = 'input window, operand 0, single buffered']
    #allocation3 [shape = 's32[1]{0}', space=sflag, size = 0x4, scoped, tag = 'scoped memory for tpu_custom_call.1']
    #allocation4 [shape = 's32[1]{0}', space=sflag, size = 0x4, scoped, tag = 'scoped memory for tpu_custom_call.1']
    #allocation5 [shape = 'u8[4096]{0}', space=vmem, size = 0x1000, scoped, tag = 'output window, operand 0, single buffered']
    %8 = vsyncpa [#allocation3], 0
    %9 = vsyncpa [#allocation4], 0
    // Predicated region
    $region2: #{tpu_custom_call.1} parent=1 // pred_check
      _
    $region3: #{tpu_custom_call.1} parent=1 // pred_check_branch
      %11 = sbr.rel (0) target = $region5
    $region4: #{tpu_custom_call.1} parent=1 // pred_region
      %s13 = ssub.s32 128, 128
      %14 = vsyncadd [#allocation3], %s13
      %s16 = sshll.u32 [#allocation2], 4
      %s17 = int_to_ptr.vmem [resolvable:$true] %s16
      %19 = dma.hbm_to_vmem [thread:$0]  %s0, 128, %s17, [#allocation3]
    $region5: #{tpu_custom_call.1} parent=1 // pred_fallthru
      _
    // Predicated region
    $region6: #{tpu_custom_call.1} parent=1 // pred_check
      _
    $region7: #{tpu_custom_call.1} parent=1 // pred_check_branch
      %21 = sbr.rel (0) target = $region9
    $region8: #{tpu_custom_call.1} parent=1 // pred_region
      %22 = dma.done [#allocation3], 128
    $region9: #{tpu_custom_call.1} parent=1 // pred_fallthru
      _
    %v23 = vld [vmem:[#allocation2] sm:$0xff]
    %v24 = vmul.f32 %v23, %v23
    %vm25 = vcmask 261120
    %v26 = vsel %vm25, %v24, 0.0
    %27 = vadd.xlane.f32.xlu0 %v26
    %v28 = vpop.xlane.xlu0 %27
    %v29 = vrsqrt.pop %v28
    %v30 = vmul.f32 %v28, %v29
    %vm31 = vcmp.eq.f32.partialorder %v28, inf
    %v32 = vsel %vm31, %v28, %v30
    %vm33 = vcmp.eq.f32.partialorder %v28, 0.0
    %v34 = vand.u32 %v28, 2147483648
    %v35 = vsel %vm33, %v34, %v32
    %v36 = vadd.f32 %v35, 1e-06
    %v37 = vrcp.pop %v36
    %v38 = vmul.f32 %v23, %v37
    %39 = vst.msk [vmem:[#allocation5] sm:$0xff] %vm25, %v38
    %v40 = vmul.f32 %v38, %v38
    %v41 = vsel %vm25, %v40, 0.0
    %42 = vadd.xlane.f32.xlu0 %v41
    %v43 = vpop.xlane.xlu0 %42
    %vm44 = vcmask 7168
    %45 = vst.msk [vmem:[%s2] sm:$0xff] %vm44, %v43
    // Predicated region
    $region10: #{tpu_custom_call.1} parent=1 // pred_check
      _
    $region11: #{tpu_custom_call.1} parent=1 // pred_check_branch
      %47 = sbr.rel (0) target = $region13
    $region12: #{tpu_custom_call.1} parent=1 // pred_region
      %s49 = ssub.s32 128, 128
      %50 = vsyncadd [#allocation4], %s49
      %s52 = sshll.u32 [#allocation5], 4
      %s53 = int_to_ptr.vmem [resolvable:$true] %s52
      %55 = dma.vmem_to_hbm [thread:$0]  %s53, 128, %s1, [#allocation4]
    $region13: #{tpu_custom_call.1} parent=1 // pred_fallthru
      _
    // Predicated region
    $region14: #{tpu_custom_call.1} parent=1 // pred_check
      _
    $region15: #{tpu_custom_call.1} parent=1 // pred_check_branch
      %57 = sbr.rel (0) target = $region17
    $region16: #{tpu_custom_call.1} parent=1 // pred_region
      _
    $region17: #{tpu_custom_call.1} parent=1 // pred_fallthru
      _
    // Predicated region
    $region18: #{tpu_custom_call.1} parent=1 // pred_check
      _
    $region19: #{tpu_custom_call.1} parent=1 // pred_check_branch
      %59 = sbr.rel (0) target = $region21
    $region20: #{tpu_custom_call.1} parent=1 // pred_region
      %60 = dma.done [#allocation4], 128
    $region21: #{tpu_custom_call.1} parent=1 // pred_fallthru
      _
    // Predicated region
    $region22: #{tpu_custom_call.1} parent=1 // pred_check
      _
    $region23: #{tpu_custom_call.1} parent=1 // pred_check_branch
      %62 = sbr.rel (0) target = $region25
    $region24: #{tpu_custom_call.1} parent=1 // pred_region
      _
    $region25: #{tpu_custom_call.1} parent=1 // pred_fallthru
      _
    %63 = vsyncpa [#allocation3], 1
    %64 = vsyncpa [#allocation4], 1

</llo_original>
